<compile_context>
chip_gen: v6e
topology: v6e:2x2x1
jax: 0.10.0
libtpu: 0.0.40
codegen_flags: <defaults>
</compile_context>

<pallas_src>
import functools

import jax
import jax.numpy as jnp
import numpy as np
from jax.experimental import pallas as pl
from jax.experimental.pallas import tpu as pltpu

RV_WEIGHT = 0.2
DZ_WEIGHT = 210.0
GAMMA = 0.9

LANE = 128                              # lane axis width
MAX_ROWS = 512                          # up to 512*128 = 65536 px per step
NUM_CORES = 2                           # leading "parallel" grid axis
VMEM_INPUT_BUDGET = 12 * 1024 * 1024    # budget for double-buffered input blocks
NUM_Q = 7                               # loss, epe2d, epedz, count, <1, <3, <5 px


def _motion_loss_kernel(*refs, n_iter, inv_p, inv_2p):
    """One grid step processes a (rows, 128) pixel slab.

    refs layout:
      est_0..est_{n-1}  : (3, rows, LANE)  flow2d_est iterations
      rev_0..rev_{n-1}  : (2, rows, LANE)  flow2d_rev iterations
      gt                : (3, rows, LANE)
      mask              : (rows, LANE) float 0/1
      out               : (8, LANE)    per-core partial sums (written last step)
      acc               : (8, LANE)    VMEM scratch; row q = partial sums of
                                       quantity q (0 loss, 1 epe2d, 2 epedz,
                                       3 valid count, 4/5/6 <1/<3/<5 px counts)
    """
    est_refs = refs[:n_iter]
    rev_refs = refs[n_iter:2 * n_iter]
    gt_ref = refs[2 * n_iter]
    mask_ref = refs[2 * n_iter + 1]
    out_ref = refs[2 * n_iter + 2]
    acc_ref = refs[2 * n_iter + 3]

    k = pl.program_id(1)

    @pl.when(k == 0)
    def _init():
        acc_ref[...] = jnp.zeros_like(acc_ref)

    gt0 = gt_ref[0].astype(jnp.float32)     # (rows, LANE)
    gt1 = gt_ref[1].astype(jnp.float32)
    gt2 = gt_ref[2].astype(jnp.float32)
    m = mask_ref[...]                       # (rows, LANE) float 0/1

    # Weighted warp loss; the 0/1 mask is identical across iterations, so it
    # is factored out and applied once (exact since m is 0/1).
    loss_slab = jnp.zeros_like(m)
    e0 = e1 = e2 = None
    for i in range(n_iter):                 # static, unrolled
        w = GAMMA ** (n_iter - 1 - i)
        w_fl = w * inv_2p                   # folded Python floats
        w_dz = w * DZ_WEIGHT * inv_p
        w_rv = w * RV_WEIGHT * inv_2p
        e0 = est_refs[i][0].astype(jnp.float32)
        e1 = est_refs[i][1].astype(jnp.float32)
        e2 = est_refs[i][2].astype(jnp.float32)
        r0 = rev_refs[i][0].astype(jnp.float32)
        r1 = rev_refs[i][1].astype(jnp.float32)
        s_fl = jnp.abs(e0 - gt0) + jnp.abs(e1 - gt1)
        s_dz = jnp.abs(e2 - gt2)
        s_rv = jnp.abs(r0 - gt0) + jnp.abs(r1 - gt1)
        loss_slab = loss_slab + (w_fl * s_fl + w_dz * s_dz + w_rv * s_rv)

    # Metrics use the *last* refinement iteration (loop-carried vars in torch).
    d0 = e0 - gt0
    d1 = e1 - gt1
    epe2d = jnp.sqrt(d0 * d0 + d1 * d1)
    epedz = jnp.abs(e2 - gt2)

    vals = (
        m * loss_slab,
        m * epe2d,
        m * epedz,
        m,
        m * (epe2d < 1.0).astype(jnp.float32),
        m * (epe2d < 3.0).astype(jnp.float32),
        m * (epe2d < 5.0).astype(jnp.float32),
    )
    for q in range(NUM_Q):
        acc_ref[q:q + 1, :] = acc_ref[q:q + 1, :] + jnp.sum(
            vals[q], axis=0, keepdims=True)

    @pl.when(k == pl.num_programs(1) - 1)
    def _finalize():
        out_ref[...] = acc_ref[...]         # row 7 stays zero from init


def _choose_rows(P, n_iter):
    """Pick the (rows, 128) slab height: as big as the VMEM budget allows,
    but no bigger than what the pixel count needs (multiple of 8)."""
    total_rows = -(-P // LANE)
    per_core = -(-total_rows // NUM_CORES)
    rows_needed = max(8, -(-per_core // 8) * 8)
    # inputs per grid step: (3+2)*n_iter + 3 (gt) + 1 (mask) slabs, x2 buffers
    bytes_per_row = (5 * n_iter + 4) * LANE * 4 * 2
    rows_budget = (VMEM_INPUT_BUDGET // bytes_per_row) // 8 * 8
    rows_budget = max(8, min(MAX_ROWS, rows_budget))
    return min(rows_needed, rows_budget)


def motion_loss(flow2d_est, flow2d_rev, flow_gt, mask, idx=0, loss=None,
                loss_weight=1.0):
    """Pallas implementation of MotionLoss.forward.

    flow2d_est: list of N arrays [B, H, W, 3]
    flow2d_rev: list of N arrays [B, H, W, 2]
    flow_gt   : [B, H, W, 3]
    mask      : [B, 1, H, W] bool (NCHW, like the torch module)
    Returns/updates a dict with the loss and metrics.
    """
    if loss is None:
        loss = {}
    n_iter = len(flow2d_est)
    B, H, W, _ = flow_gt.shape
    P = B * H * W

    rows = _choose_rows(P, n_iter)
    chunk = NUM_CORES * rows * LANE
    P_pad = -(-P // chunk) * chunk          # pad pixels; padded mask is 0
    R_total = P_pad // LANE
    steps_per_core = (R_total // rows) // NUM_CORES

    def to_cf(x, c):
        # [B,H,W,c] -> [c, R_total, LANE]: channels-first, pixels on (sublane, lane)
        x = x.astype(jnp.float32).reshape(P, c).T
        if P_pad != P:
            x = jnp.pad(x, ((0, 0), (0, P_pad - P)))
        return x.reshape(c, R_total, LANE)

    est_list = [to_cf(e, 3) for e in flow2d_est]
    rev_list = [to_cf(r, 2) for r in flow2d_rev]
    gt = to_cf(flow_gt, 3)
    m = mask.astype(jnp.float32).reshape(P)
    if P_pad != P:
        m = jnp.pad(m, (0, P_pad - P))
    m = m.reshape(R_total, LANE)

    est_spec = pl.BlockSpec((3, rows, LANE),
                            lambda c, k: (0, c * steps_per_core + k, 0))
    rev_spec = pl.BlockSpec((2, rows, LANE),
                            lambda c, k: (0, c * steps_per_core + k, 0))
    gt_spec = pl.BlockSpec((3, rows, LANE),
                           lambda c, k: (0, c * steps_per_core + k, 0))
    mask_spec = pl.BlockSpec((rows, LANE),
                             lambda c, k: (c * steps_per_core + k, 0))

    kernel = functools.partial(_motion_loss_kernel, n_iter=n_iter,
                               inv_p=1.0 / P, inv_2p=1.0 / (2.0 * P))

    out = pl.pallas_call(
        kernel,
        out_shape=jax.ShapeDtypeStruct((NUM_CORES * 8, LANE), jnp.float32),
        grid_spec=pltpu.PrefetchScalarGridSpec(
            num_scalar_prefetch=0,
            grid=(NUM_CORES, steps_per_core),
            in_specs=[est_spec] * n_iter + [rev_spec] * n_iter
                     + [gt_spec, mask_spec],
            out_specs=pl.BlockSpec((8, LANE), lambda c, k: (c, 0)),
            scratch_shapes=[pltpu.VMEM((8, LANE), jnp.float32)],
        ),
        compiler_params=pltpu.CompilerParams(
            dimension_semantics=("parallel", "arbitrary"),
            vmem_limit_bytes=32 * 1024 * 1024),
    )(*est_list, *rev_list, gt, m)

    # tiny final reduction (2 cores x 8 rows x 128 lanes) in plain JAX glue
    sums = jnp.sum(out.reshape(NUM_CORES, 8, LANE), axis=(0, 2))
    cnt = sums[3]
    loss['loss_warp{}'.format(idx)] = sums[0] * loss_weight
    loss['epe2d_warp{}'.format(idx)] = sums[1] / cnt
    loss['epedz_warp{}'.format(idx)] = sums[2] / cnt
    loss['1px_warp{}'.format(idx)] = sums[4] / cnt
    loss['3px_warp{}'.format(idx)] = sums[5] / cnt
    loss['5px_warp{}'.format(idx)] = sums[6] / cnt
    return loss


def motion_loss_reference(flow2d_est, flow2d_rev, flow_gt, mask, idx=0,
                          loss_weight=1.0):
    """Pure-JAX reference mirroring the PyTorch forward semantics."""
    valid = jnp.transpose(mask, (0, 2, 3, 1)).astype(jnp.float32)   # [B,H,W,1]
    n_iter = len(flow2d_est)
    total = 0.0
    for i in range(n_iter):
        w = GAMMA ** (n_iter - i - 1)
        fl_rev = flow2d_rev[i]
        fl_est, dz_est = flow2d_est[i][..., :2], flow2d_est[i][..., 2:]
        fl_gt, dz_gt = flow_gt[..., :2], flow_gt[..., 2:]
        total += w * jnp.mean(valid * jnp.abs(fl_est - fl_gt))
        total += w * DZ_WEIGHT * jnp.mean(valid * jnp.abs(dz_est - dz_gt))
        total += w * RV_WEIGHT * jnp.mean(valid * jnp.abs(fl_rev - fl_gt))
    epe2d = jnp.linalg.norm(fl_est - fl_gt, axis=-1).reshape(-1)
    epedz = jnp.abs(dz_est - dz_gt)[..., 0].reshape(-1)
    vm = valid.reshape(-1) > 0.5
    cnt = jnp.sum(vm.astype(jnp.float32))
    d = {
        'loss_warp{}'.format(idx): total * loss_weight,
        'epe2d_warp{}'.format(idx): jnp.sum(jnp.where(vm, epe2d, 0.0)) / cnt,
        'epedz_warp{}'.format(idx): jnp.sum(jnp.where(vm, epedz, 0.0)) / cnt,
        '1px_warp{}'.format(idx): jnp.sum(jnp.where(vm & (epe2d < 1.0), 1.0, 0.0)) / cnt,
        '3px_warp{}'.format(idx): jnp.sum(jnp.where(vm & (epe2d < 3.0), 1.0, 0.0)) / cnt,
        '5px_warp{}'.format(idx): jnp.sum(jnp.where(vm & (epe2d < 5.0), 1.0, 0.0)) / cnt,
    }
    return d


if __name__ == "__main__":
    # small shapes: B=2, H=16, W=16, N=3 refinement iterations
    key = jax.random.PRNGKey(0)
    B, H, W, N = 2, 16, 16, 3
    keys = jax.random.split(key, 2 * N + 2)
    flow2d_est = [jax.random.normal(keys[i], (B, H, W, 3), jnp.float32)
                  for i in range(N)]
    flow2d_rev = [jax.random.normal(keys[N + i], (B, H, W, 2), jnp.float32)
                  for i in range(N)]
    flow_gt = jax.random.normal(keys[2 * N], (B, H, W, 3), jnp.float32)
    mask = jax.random.uniform(keys[2 * N + 1], (B, 1, H, W)) > 0.3   # bool

    result = motion_loss(flow2d_est, flow2d_rev, flow_gt, mask, idx=0)
    result = jax.tree_util.tree_map(jax.block_until_ready, result)

    # correctness check against a pure-JAX reference of the torch forward
    ref = motion_loss_reference(flow2d_est, flow2d_rev, flow_gt, mask, idx=0)
    for k_name in ref:
        np.testing.assert_allclose(np.asarray(result[k_name]),
                                   np.asarray(ref[k_name]),
                                   rtol=2e-3, atol=1e-4)

    print("KERNEL_OK")
</pallas_src>

<mosaic_0001>
module attributes {stable_mosaic.version = 11 : i64} {
  func.func @_motion_loss_kernel(%arg0: i32, %arg1: i32, %arg2: memref<3x8x128xf32, #tpu.memory_space<vmem>>, %arg3: memref<3x8x128xf32, #tpu.memory_space<vmem>>, %arg4: memref<3x8x128xf32, #tpu.memory_space<vmem>>, %arg5: memref<2x8x128xf32, #tpu.memory_space<vmem>>, %arg6: memref<2x8x128xf32, #tpu.memory_space<vmem>>, %arg7: memref<2x8x128xf32, #tpu.memory_space<vmem>>, %arg8: memref<3x8x128xf32, #tpu.memory_space<vmem>>, %arg9: memref<8x128xf32, #tpu.memory_space<vmem>>, %arg10: memref<8x128xf32, #tpu.memory_space<vmem>>, %arg11: memref<8x128xf32, #tpu.memory_space<vmem>>) attributes {dimension_semantics = [#tpu.dimension_semantics<parallel>, #tpu.dimension_semantics<arbitrary>], iteration_bounds = array<i64: 2, 1>, scalar_prefetch = 0 : i64, scratch_operands = 1 : i64, tpu.core_type = #tpu.core_type<tc>, window_params = [{transform_indices = @transform_0, window_bounds = array<i64: 3, 8, 128>}, {transform_indices = @transform_1, window_bounds = array<i64: 3, 8, 128>}, {transform_indices = @transform_2, window_bounds = array<i64: 3, 8, 128>}, {transform_indices = @transform_3, window_bounds = array<i64: 2, 8, 128>}, {transform_indices = @transform_4, window_bounds = array<i64: 2, 8, 128>}, {transform_indices = @transform_5, window_bounds = array<i64: 2, 8, 128>}, {transform_indices = @transform_6, window_bounds = array<i64: 3, 8, 128>}, {transform_indices = @transform_7, window_bounds = array<i64: 8, 128>}, {transform_indices = @transform_8, window_bounds = array<i64: 8, 128>}]} {
    %c0_i32 = arith.constant 0 : i32
    %0 = arith.cmpi eq, %arg1, %c0_i32 : i32
    %1 = arith.extui %0 : i1 to i32
    %c0_i32_0 = arith.constant 0 : i32
    %2 = arith.cmpi ne, %1, %c0_i32_0 : i32
    scf.if %2 {
      %cst_99 = arith.constant 0.000000e+00 : f32
      %168 = vector.broadcast %cst_99 : f32 to vector<8x128xf32>
      %c0_100 = arith.constant 0 : index
      %c0_101 = arith.constant 0 : index
      %169 = vector.load %arg11[%c0_100, %c0_101] : memref<8x128xf32, #tpu.memory_space<vmem>>, vector<8x128xf32>
      tpu.vector_store %arg11[%c0_100, %c0_101], %168 {strides = array<i32>} : memref<8x128xf32, #tpu.memory_space<vmem>>, vector<8x128xf32>,
    } else {
    }
    %c0 = arith.constant 0 : index
    %c0_1 = arith.constant 0 : index
    %c0_2 = arith.constant 0 : index
    %3 = vector.load %arg8[%c0, %c0_1, %c0_2] : memref<3x8x128xf32, #tpu.memory_space<vmem>>, vector<1x8x128xf32>
    %4 = vector.shape_cast %3 : vector<1x8x128xf32> to vector<8x128xf32>
    %c1 = arith.constant 1 : index
    %c0_3 = arith.constant 0 : index
    %c0_4 = arith.constant 0 : index
    %5 = vector.load %arg8[%c1, %c0_3, %c0_4] : memref<3x8x128xf32, #tpu.memory_space<vmem>>, vector<1x8x128xf32>
    %6 = vector.shape_cast %5 : vector<1x8x128xf32> to vector<8x128xf32>
    %c2 = arith.constant 2 : index
    %c0_5 = arith.constant 0 : index
    %c0_6 = arith.constant 0 : index
    %7 = vector.load %arg8[%c2, %c0_5, %c0_6] : memref<3x8x128xf32, #tpu.memory_space<vmem>>, vector<1x8x128xf32>
    %8 = vector.shape_cast %7 : vector<1x8x128xf32> to vector<8x128xf32>
    %c0_7 = arith.constant 0 : index
    %c0_8 = arith.constant 0 : index
    %9 = vector.load %arg9[%c0_7, %c0_8] : memref<8x128xf32, #tpu.memory_space<vmem>>, vector<8x128xf32>
    %cst = arith.constant 0.000000e+00 : f32
    %10 = vector.broadcast %cst : f32 to vector<8x128xf32>
    %c0_9 = arith.constant 0 : index
    %c0_10 = arith.constant 0 : index
    %c0_11 = arith.constant 0 : index
    %11 = vector.load %arg2[%c0_9, %c0_10, %c0_11] : memref<3x8x128xf32, #tpu.memory_space<vmem>>, vector<1x8x128xf32>
    %12 = vector.shape_cast %11 : vector<1x8x128xf32> to vector<8x128xf32>
    %c1_12 = arith.constant 1 : index
    %c0_13 = arith.constant 0 : index
    %c0_14 = arith.constant 0 : index
    %13 = vector.load %arg2[%c1_12, %c0_13, %c0_14] : memref<3x8x128xf32, #tpu.memory_space<vmem>>, vector<1x8x128xf32>
    %14 = vector.shape_cast %13 : vector<1x8x128xf32> to vector<8x128xf32>
    %c2_15 = arith.constant 2 : index
    %c0_16 = arith.constant 0 : index
    %c0_17 = arith.constant 0 : index
    %15 = vector.load %arg2[%c2_15, %c0_16, %c0_17] : memref<3x8x128xf32, #tpu.memory_space<vmem>>, vector<1x8x128xf32>
    %16 = vector.shape_cast %15 : vector<1x8x128xf32> to vector<8x128xf32>
    %c0_18 = arith.constant 0 : index
    %c0_19 = arith.constant 0 : index
    %c0_20 = arith.constant 0 : index
    %17 = vector.load %arg5[%c0_18, %c0_19, %c0_20] : memref<2x8x128xf32, #tpu.memory_space<vmem>>, vector<1x8x128xf32>
    %18 = vector.shape_cast %17 : vector<1x8x128xf32> to vector<8x128xf32>
    %c1_21 = arith.constant 1 : index
    %c0_22 = arith.constant 0 : index
    %c0_23 = arith.constant 0 : index
    %19 = vector.load %arg5[%c1_21, %c0_22, %c0_23] : memref<2x8x128xf32, #tpu.memory_space<vmem>>, vector<1x8x128xf32>
    %20 = vector.shape_cast %19 : vector<1x8x128xf32> to vector<8x128xf32>
    %21 = arith.subf %12, %4 : vector<8x128xf32>
    %22 = math.absf %21 : vector<8x128xf32>
    %23 = arith.subf %14, %6 : vector<8x128xf32>
    %24 = math.absf %23 : vector<8x128xf32>
    %25 = arith.addf %22, %24 : vector<8x128xf32>
    %26 = arith.subf %16, %8 : vector<8x128xf32>
    %27 = math.absf %26 : vector<8x128xf32>
    %28 = arith.subf %18, %4 : vector<8x128xf32>
    %29 = math.absf %28 : vector<8x128xf32>
    %30 = arith.subf %20, %6 : vector<8x128xf32>
    %31 = math.absf %30 : vector<8x128xf32>
    %32 = arith.addf %29, %31 : vector<8x128xf32>
    %cst_24 = arith.constant 7.91015627E-4 : f32
    %33 = vector.broadcast %cst_24 : f32 to vector<8x128xf32>
    %34 = arith.mulf %33, %25 : vector<8x128xf32>
    %cst_25 = arith.constant 0.332226574 : f32
    %35 = vector.broadcast %cst_25 : f32 to vector<8x128xf32>
    %36 = arith.mulf %35, %27 : vector<8x128xf32>
    %37 = arith.addf %34, %36 : vector<8x128xf32>
    %cst_26 = arith.constant 1.58203125E-4 : f32
    %38 = vector.broadcast %cst_26 : f32 to vector<8x128xf32>
    %39 = arith.mulf %38, %32 : vector<8x128xf32>
    %40 = arith.addf %37, %39 : vector<8x128xf32>
    %41 = arith.addf %10, %40 : vector<8x128xf32>
    %c0_27 = arith.constant 0 : index
    %c0_28 = arith.constant 0 : index
    %c0_29 = arith.constant 0 : index
    %42 = vector.load %arg3[%c0_27, %c0_28, %c0_29] : memref<3x8x128xf32, #tpu.memory_space<vmem>>, vector<1x8x128xf32>
    %43 = vector.shape_cast %42 : vector<1x8x128xf32> to vector<8x128xf32>
    %c1_30 = arith.constant 1 : index
    %c0_31 = arith.constant 0 : index
    %c0_32 = arith.constant 0 : index
    %44 = vector.load %arg3[%c1_30, %c0_31, %c0_32] : memref<3x8x128xf32, #tpu.memory_space<vmem>>, vector<1x8x128xf32>
    %45 = vector.shape_cast %44 : vector<1x8x128xf32> to vector<8x128xf32>
    %c2_33 = arith.constant 2 : index
    %c0_34 = arith.constant 0 : index
    %c0_35 = arith.constant 0 : index
    %46 = vector.load %arg3[%c2_33, %c0_34, %c0_35] : memref<3x8x128xf32, #tpu.memory_space<vmem>>, vector<1x8x128xf32>
    %47 = vector.shape_cast %46 : vector<1x8x128xf32> to vector<8x128xf32>
    %c0_36 = arith.constant 0 : index
    %c0_37 = arith.constant 0 : index
    %c0_38 = arith.constant 0 : index
    %48 = vector.load %arg6[%c0_36, %c0_37, %c0_38] : memref<2x8x128xf32, #tpu.memory_space<vmem>>, vector<1x8x128xf32>
    %49 = vector.shape_cast %48 : vector<1x8x128xf32> to vector<8x128xf32>
    %c1_39 = arith.constant 1 : index
    %c0_40 = arith.constant 0 : index
    %c0_41 = arith.constant 0 : index
    %50 = vector.load %arg6[%c1_39, %c0_40, %c0_41] : memref<2x8x128xf32, #tpu.memory_space<vmem>>, vector<1x8x128xf32>
    %51 = vector.shape_cast %50 : vector<1x8x128xf32> to vector<8x128xf32>
    %52 = arith.subf %43, %4 : vector<8x128xf32>
    %53 = math.absf %52 : vector<8x128xf32>
    %54 = arith.subf %45, %6 : vector<8x128xf32>
    %55 = math.absf %54 : vector<8x128xf32>
    %56 = arith.addf %53, %55 : vector<8x128xf32>
    %57 = arith.subf %47, %8 : vector<8x128xf32>
    %58 = math.absf %57 : vector<8x128xf32>
    %59 = arith.subf %49, %4 : vector<8x128xf32>
    %60 = math.absf %59 : vector<8x128xf32>
    %61 = arith.subf %51, %6 : vector<8x128xf32>
    %62 = math.absf %61 : vector<8x128xf32>
    %63 = arith.addf %60, %62 : vector<8x128xf32>
    %cst_42 = arith.constant 8.78906226E-4 : f32
    %64 = vector.broadcast %cst_42 : f32 to vector<8x128xf32>
    %65 = arith.mulf %64, %56 : vector<8x128xf32>
    %cst_43 = arith.constant 0.369140625 : f32
    %66 = vector.broadcast %cst_43 : f32 to vector<8x128xf32>
    %67 = arith.mulf %66, %58 : vector<8x128xf32>
    %68 = arith.addf %65, %67 : vector<8x128xf32>
    %cst_44 = arith.constant 1.75781257E-4 : f32
    %69 = vector.broadcast %cst_44 : f32 to vector<8x128xf32>
    %70 = arith.mulf %69, %63 : vector<8x128xf32>
    %71 = arith.addf %68, %70 : vector<8x128xf32>
    %72 = arith.addf %41, %71 : vector<8x128xf32>
    %c0_45 = arith.constant 0 : index
    %c0_46 = arith.constant 0 : index
    %c0_47 = arith.constant 0 : index
    %73 = vector.load %arg4[%c0_45, %c0_46, %c0_47] : memref<3x8x128xf32, #tpu.memory_space<vmem>>, vector<1x8x128xf32>
    %74 = vector.shape_cast %73 : vector<1x8x128xf32> to vector<8x128xf32>
    %c1_48 = arith.constant 1 : index
    %c0_49 = arith.constant 0 : index
    %c0_50 = arith.constant 0 : index
    %75 = vector.load %arg4[%c1_48, %c0_49, %c0_50] : memref<3x8x128xf32, #tpu.memory_space<vmem>>, vector<1x8x128xf32>
    %76 = vector.shape_cast %75 : vector<1x8x128xf32> to vector<8x128xf32>
    %c2_51 = arith.constant 2 : index
    %c0_52 = arith.constant 0 : index
    %c0_53 = arith.constant 0 : index
    %77 = vector.load %arg4[%c2_51, %c0_52, %c0_53] : memref<3x8x128xf32, #tpu.memory_space<vmem>>, vector<1x8x128xf32>
    %78 = vector.shape_cast %77 : vector<1x8x128xf32> to vector<8x128xf32>
    %c0_54 = arith.constant 0 : index
    %c0_55 = arith.constant 0 : index
    %c0_56 = arith.constant 0 : index
    %79 = vector.load %arg7[%c0_54, %c0_55, %c0_56] : memref<2x8x128xf32, #tpu.memory_space<vmem>>, vector<1x8x128xf32>
    %80 = vector.shape_cast %79 : vector<1x8x128xf32> to vector<8x128xf32>
    %c1_57 = arith.constant 1 : index
    %c0_58 = arith.constant 0 : index
    %c0_59 = arith.constant 0 : index
    %81 = vector.load %arg7[%c1_57, %c0_58, %c0_59] : memref<2x8x128xf32, #tpu.memory_space<vmem>>, vector<1x8x128xf32>
    %82 = vector.shape_cast %81 : vector<1x8x128xf32> to vector<8x128xf32>
    %83 = arith.subf %74, %4 : vector<8x128xf32>
    %84 = math.absf %83 : vector<8x128xf32>
    %85 = arith.subf %76, %6 : vector<8x128xf32>
    %86 = math.absf %85 : vector<8x128xf32>
    %87 = arith.addf %84, %86 : vector<8x128xf32>
    %88 = arith.subf %78, %8 : vector<8x128xf32>
    %89 = math.absf %88 : vector<8x128xf32>
    %90 = arith.subf %80, %4 : vector<8x128xf32>
    %91 = math.absf %90 : vector<8x128xf32>
    %92 = arith.subf %82, %6 : vector<8x128xf32>
    %93 = math.absf %92 : vector<8x128xf32>
    %94 = arith.addf %91, %93 : vector<8x128xf32>
    %cst_60 = arith.constant 9.765625E-4 : f32
    %95 = vector.broadcast %cst_60 : f32 to vector<8x128xf32>
    %96 = arith.mulf %95, %87 : vector<8x128xf32>
    %cst_61 = arith.constant 0.41015625 : f32
    %97 = vector.broadcast %cst_61 : f32 to vector<8x128xf32>
    %98 = arith.mulf %97, %89 : vector<8x128xf32>
    %99 = arith.addf %96, %98 : vector<8x128xf32>
    %cst_62 = arith.constant 1.95312503E-4 : f32
    %100 = vector.broadcast %cst_62 : f32 to vector<8x128xf32>
    %101 = arith.mulf %100, %94 : vector<8x128xf32>
    %102 = arith.addf %99, %101 : vector<8x128xf32>
    %103 = arith.addf %72, %102 : vector<8x128xf32>
    %104 = arith.subf %74, %4 : vector<8x128xf32>
    %105 = arith.subf %76, %6 : vector<8x128xf32>
    %106 = arith.mulf %104, %104 : vector<8x128xf32>
    %107 = arith.mulf %105, %105 : vector<8x128xf32>
    %108 = arith.addf %106, %107 : vector<8x128xf32>
    %109 = math.sqrt %108 : vector<8x128xf32>
    %110 = arith.subf %78, %8 : vector<8x128xf32>
    %111 = math.absf %110 : vector<8x128xf32>
    %112 = arith.mulf %9, %103 : vector<8x128xf32>
    %113 = arith.mulf %9, %109 : vector<8x128xf32>
    %114 = arith.mulf %9, %111 : vector<8x128xf32>
    %cst_63 = arith.constant 1.000000e+00 : f32
    %115 = vector.broadcast %cst_63 : f32 to vector<8x128xf32>
    %116 = arith.cmpf olt, %109, %115 : vector<8x128xf32>
    %117 = arith.extui %116 : vector<8x128xi1> to vector<8x128xi32>
    %118 = arith.sitofp %117 : vector<8x128xi32> to vector<8x128xf32>
    %119 = arith.mulf %9, %118 : vector<8x128xf32>
    %cst_64 = arith.constant 3.000000e+00 : f32
    %120 = vector.broadcast %cst_64 : f32 to vector<8x128xf32>
    %121 = arith.cmpf olt, %109, %120 : vector<8x128xf32>
    %122 = arith.extui %121 : vector<8x128xi1> to vector<8x128xi32>
    %123 = arith.sitofp %122 : vector<8x128xi32> to vector<8x128xf32>
    %124 = arith.mulf %9, %123 : vector<8x128xf32>
    %cst_65 = arith.constant 5.000000e+00 : f32
    %125 = vector.broadcast %cst_65 : f32 to vector<8x128xf32>
    %126 = arith.cmpf olt, %109, %125 : vector<8x128xf32>
    %127 = arith.extui %126 : vector<8x128xi1> to vector<8x128xi32>
    %128 = arith.sitofp %127 : vector<8x128xi32> to vector<8x128xf32>
    %129 = arith.mulf %9, %128 : vector<8x128xf32>
    %c0_66 = arith.constant 0 : index
    %c0_67 = arith.constant 0 : index
    %130 = vector.load %arg11[%c0_66, %c0_67] : memref<8x128xf32, #tpu.memory_space<vmem>>, vector<1x128xf32>
    %cst_68 = arith.constant dense<0.000000e+00> : vector<128xf32>
    %131 = vector.multi_reduction <add>, %112, %cst_68 [0] : vector<8x128xf32> to vector<128xf32>
    %132 = vector.shape_cast %131 : vector<128xf32> to vector<1x128xf32>
    %133 = arith.addf %130, %132 : vector<1x128xf32>
    %c0_69 = arith.constant 0 : index
    %c0_70 = arith.constant 0 : index
    %134 = vector.load %arg11[%c0_69, %c0_70] : memref<8x128xf32, #tpu.memory_space<vmem>>, vector<1x128xf32>
    tpu.vector_store %arg11[%c0_69, %c0_70], %133 {strides = array<i32>} : memref<8x128xf32, #tpu.memory_space<vmem>>, vector<1x128xf32>,
    %c1_71 = arith.constant 1 : index
    %c0_72 = arith.constant 0 : index
    %135 = vector.load %arg11[%c1_71, %c0_72] : memref<8x128xf32, #tpu.memory_space<vmem>>, vector<1x128xf32>
    %cst_73 = arith.constant dense<0.000000e+00> : vector<128xf32>
    %136 = vector.multi_reduction <add>, %113, %cst_73 [0] : vector<8x128xf32> to vector<128xf32>
    %137 = vector.shape_cast %136 : vector<128xf32> to vector<1x128xf32>
    %138 = arith.addf %135, %137 : vector<1x128xf32>
    %c1_74 = arith.constant 1 : index
    %c0_75 = arith.constant 0 : index
    %139 = vector.load %arg11[%c1_74, %c0_75] : memref<8x128xf32, #tpu.memory_space<vmem>>, vector<1x128xf32>
    tpu.vector_store %arg11[%c1_74, %c0_75], %138 {strides = array<i32>} : memref<8x128xf32, #tpu.memory_space<vmem>>, vector<1x128xf32>,
    %c2_76 = arith.constant 2 : index
    %c0_77 = arith.constant 0 : index
    %140 = vector.load %arg11[%c2_76, %c0_77] : memref<8x128xf32, #tpu.memory_space<vmem>>, vector<1x128xf32>
    %cst_78 = arith.constant dense<0.000000e+00> : vector<128xf32>
    %141 = vector.multi_reduction <add>, %114, %cst_78 [0] : vector<8x128xf32> to vector<128xf32>
    %142 = vector.shape_cast %141 : vector<128xf32> to vector<1x128xf32>
    %143 = arith.addf %140, %142 : vector<1x128xf32>
    %c2_79 = arith.constant 2 : index
    %c0_80 = arith.constant 0 : index
    %144 = vector.load %arg11[%c2_79, %c0_80] : memref<8x128xf32, #tpu.memory_space<vmem>>, vector<1x128xf32>
    tpu.vector_store %arg11[%c2_79, %c0_80], %143 {strides = array<i32>} : memref<8x128xf32, #tpu.memory_space<vmem>>, vector<1x128xf32>,
    %c3 = arith.constant 3 : index
    %c0_81 = arith.constant 0 : index
    %145 = vector.load %arg11[%c3, %c0_81] : memref<8x128xf32, #tpu.memory_space<vmem>>, vector<1x128xf32>
    %cst_82 = arith.constant dense<0.000000e+00> : vector<128xf32>
    %146 = vector.multi_reduction <add>, %9, %cst_82 [0] : vector<8x128xf32> to vector<128xf32>
    %147 = vector.shape_cast %146 : vector<128xf32> to vector<1x128xf32>
    %148 = arith.addf %145, %147 : vector<1x128xf32>
    %c3_83 = arith.constant 3 : index
    %c0_84 = arith.constant 0 : index
    %149 = vector.load %arg11[%c3_83, %c0_84] : memref<8x128xf32, #tpu.memory_space<vmem>>, vector<1x128xf32>
    tpu.vector_store %arg11[%c3_83, %c0_84], %148 {strides = array<i32>} : memref<8x128xf32, #tpu.memory_space<vmem>>, vector<1x128xf32>,
    %c4 = arith.constant 4 : index
    %c0_85 = arith.constant 0 : index
    %150 = vector.load %arg11[%c4, %c0_85] : memref<8x128xf32, #tpu.memory_space<vmem>>, vector<1x128xf32>
    %cst_86 = arith.constant dense<0.000000e+00> : vector<128xf32>
    %151 = vector.multi_reduction <add>, %119, %cst_86 [0] : vector<8x128xf32> to vector<128xf32>
    %152 = vector.shape_cast %151 : vector<128xf32> to vector<1x128xf32>
    %153 = arith.addf %150, %152 : vector<1x128xf32>
    %c4_87 = arith.constant 4 : index
    %c0_88 = arith.constant 0 : index
    %154 = vector.load %arg11[%c4_87, %c0_88] : memref<8x128xf32, #tpu.memory_space<vmem>>, vector<1x128xf32>
    tpu.vector_store %arg11[%c4_87, %c0_88], %153 {strides = array<i32>} : memref<8x128xf32, #tpu.memory_space<vmem>>, vector<1x128xf32>,
    %c5 = arith.constant 5 : index
    %c0_89 = arith.constant 0 : index
    %155 = vector.load %arg11[%c5, %c0_89] : memref<8x128xf32, #tpu.memory_space<vmem>>, vector<1x128xf32>
    %cst_90 = arith.constant dense<0.000000e+00> : vector<128xf32>
    %156 = vector.multi_reduction <add>, %124, %cst_90 [0] : vector<8x128xf32> to vector<128xf32>
    %157 = vector.shape_cast %156 : vector<128xf32> to vector<1x128xf32>
    %158 = arith.addf %155, %157 : vector<1x128xf32>
    %c5_91 = arith.constant 5 : index
    %c0_92 = arith.constant 0 : index
    %159 = vector.load %arg11[%c5_91, %c0_92] : memref<8x128xf32, #tpu.memory_space<vmem>>, vector<1x128xf32>
    tpu.vector_store %arg11[%c5_91, %c0_92], %158 {strides = array<i32>} : memref<8x128xf32, #tpu.memory_space<vmem>>, vector<1x128xf32>,
    %c6 = arith.constant 6 : index
    %c0_93 = arith.constant 0 : index
    %160 = vector.load %arg11[%c6, %c0_93] : memref<8x128xf32, #tpu.memory_space<vmem>>, vector<1x128xf32>
    %cst_94 = arith.constant dense<0.000000e+00> : vector<128xf32>
    %161 = vector.multi_reduction <add>, %129, %cst_94 [0] : vector<8x128xf32> to vector<128xf32>
    %162 = vector.shape_cast %161 : vector<128xf32> to vector<1x128xf32>
    %163 = arith.addf %160, %162 : vector<1x128xf32>
    %c6_95 = arith.constant 6 : index
    %c0_96 = arith.constant 0 : index
    %164 = vector.load %arg11[%c6_95, %c0_96] : memref<8x128xf32, #tpu.memory_space<vmem>>, vector<1x128xf32>
    tpu.vector_store %arg11[%c6_95, %c0_96], %163 {strides = array<i32>} : memref<8x128xf32, #tpu.memory_space<vmem>>, vector<1x128xf32>,
    %c0_i32_97 = arith.constant 0 : i32
    %165 = arith.cmpi eq, %arg1, %c0_i32_97 : i32
    %166 = arith.extui %165 : i1 to i32
    %c0_i32_98 = arith.constant 0 : i32
    %167 = arith.cmpi ne, %166, %c0_i32_98 : i32
    scf.if %167 {
      %c0_99 = arith.constant 0 : index
      %c0_100 = arith.constant 0 : index
      %168 = vector.load %arg11[%c0_99, %c0_100] : memref<8x128xf32, #tpu.memory_space<vmem>>, vector<8x128xf32>
      %c0_101 = arith.constant 0 : index
      %c0_102 = arith.constant 0 : index
      %169 = vector.load %arg10[%c0_101, %c0_102] : memref<8x128xf32, #tpu.memory_space<vmem>>, vector<8x128xf32>
      tpu.vector_store %arg10[%c0_101, %c0_102], %168 {strides = array<i32>} : memref<8x128xf32, #tpu.memory_space<vmem>>, vector<8x128xf32>,
    } else {
    }
    return
  }
  func.func @transform_0(%arg0: i32, %arg1: i32) -> (i32, i32, i32) {
    %c1_i32 = arith.constant 1 : i32
    %0 = arith.muli %arg0, %c1_i32 : i32
    %1 = arith.addi %0, %arg1 : i32
    %c0_i32 = arith.constant 0 : i32
    %c0_i32_0 = arith.constant 0 : i32
    %c0_i32_1 = arith.constant 0 : i32
    return %c0_i32, %1, %c0_i32_0 : i32, i32, i32
  }
  func.func @transform_1(%arg0: i32, %arg1: i32) -> (i32, i32, i32) {
    %c1_i32 = arith.constant 1 : i32
    %0 = arith.muli %arg0, %c1_i32 : i32
    %1 = arith.addi %0, %arg1 : i32
    %c0_i32 = arith.constant 0 : i32
    %c0_i32_0 = arith.constant 0 : i32
    %c0_i32_1 = arith.constant 0 : i32
    return %c0_i32, %1, %c0_i32_0 : i32, i32, i32
  }
  func.func @transform_2(%arg0: i32, %arg1: i32) -> (i32, i32, i32) {
    %c1_i32 = arith.constant 1 : i32
    %0 = arith.muli %arg0, %c1_i32 : i32
    %1 = arith.addi %0, %arg1 : i32
    %c0_i32 = arith.constant 0 : i32
    %c0_i32_0 = arith.constant 0 : i32
    %c0_i32_1 = arith.constant 0 : i32
    return %c0_i32, %1, %c0_i32_0 : i32, i32, i32
  }
  func.func @transform_3(%arg0: i32, %arg1: i32) -> (i32, i32, i32) {
    %c1_i32 = arith.constant 1 : i32
    %0 = arith.muli %arg0, %c1_i32 : i32
    %1 = arith.addi %0, %arg1 : i32
    %c0_i32 = arith.constant 0 : i32
    %c0_i32_0 = arith.constant 0 : i32
    %c0_i32_1 = arith.constant 0 : i32
    return %c0_i32, %1, %c0_i32_0 : i32, i32, i32
  }
  func.func @transform_4(%arg0: i32, %arg1: i32) -> (i32, i32, i32) {
    %c1_i32 = arith.constant 1 : i32
    %0 = arith.muli %arg0, %c1_i32 : i32
    %1 = arith.addi %0, %arg1 : i32
    %c0_i32 = arith.constant 0 : i32
    %c0_i32_0 = arith.constant 0 : i32
    %c0_i32_1 = arith.constant 0 : i32
    return %c0_i32, %1, %c0_i32_0 : i32, i32, i32
  }
  func.func @transform_5(%arg0: i32, %arg1: i32) -> (i32, i32, i32) {
    %c1_i32 = arith.constant 1 : i32
    %0 = arith.muli %arg0, %c1_i32 : i32
    %1 = arith.addi %0, %arg1 : i32
    %c0_i32 = arith.constant 0 : i32
    %c0_i32_0 = arith.constant 0 : i32
    %c0_i32_1 = arith.constant 0 : i32
    return %c0_i32, %1, %c0_i32_0 : i32, i32, i32
  }
  func.func @transform_6(%arg0: i32, %arg1: i32) -> (i32, i32, i32) {
    %c1_i32 = arith.constant 1 : i32
    %0 = arith.muli %arg0, %c1_i32 : i32
    %1 = arith.addi %0, %arg1 : i32
    %c0_i32 = arith.constant 0 : i32
    %c0_i32_0 = arith.constant 0 : i32
    %c0_i32_1 = arith.constant 0 : i32
    return %c0_i32, %1, %c0_i32_0 : i32, i32, i32
  }
  func.func @transform_7(%arg0: i32, %arg1: i32) -> (i32, i32) {
    %c1_i32 = arith.constant 1 : i32
    %0 = arith.muli %arg0, %c1_i32 : i32
    %1 = arith.addi %0, %arg1 : i32
    %c0_i32 = arith.constant 0 : i32
    %c0_i32_0 = arith.constant 0 : i32
    return %1, %c0_i32 : i32, i32
  }
  func.func @transform_8(%arg0: i32, %arg1: i32) -> (i32, i32) {
    %c0_i32 = arith.constant 0 : i32
    %c0_i32_0 = arith.constant 0 : i32
    return %arg0, %c0_i32 : i32, i32
  }
}

</mosaic_0001>

<llo_original>
// kernel: tpu_custom_call.1
$region0: #{tpu_custom_call.1}
  #allocation0 [shape = 'u32[]', space=smem, size = 0x4, offset = 0x4, fixed_abs, tag = 'smem constant byte address 0x4 - core index']
  #allocation1 [shape = 'u32[144,128]{1,0:T(1,128)}', space=vmem, size = 0x12000, scoped, tag = 'internal scratch']
  #allocation2 [shape = 'f32[8,128]{1,0:T(8,128)}', space=vmem, size = 0x1000, scoped, tag = 'scratch operand']
  %s0 = inlined_call_operand.hbm [shape: f32[3,16,128], index: 0, kind: input, shape index: {}]
  %s1 = inlined_call_operand.hbm [shape: f32[3,16,128], index: 1, kind: input, shape index: {}]
  %s2 = inlined_call_operand.hbm [shape: f32[3,16,128], index: 2, kind: input, shape index: {}]
  %s3 = inlined_call_operand.hbm [shape: f32[2,16,128], index: 3, kind: input, shape index: {}]
  %s4 = inlined_call_operand.hbm [shape: f32[2,16,128], index: 4, kind: input, shape index: {}]
  %s5 = inlined_call_operand.hbm [shape: f32[2,16,128], index: 5, kind: input, shape index: {}]
  %s6 = inlined_call_operand.hbm [shape: f32[3,16,128], index: 6, kind: input, shape index: {}]
  %s7 = inlined_call_operand.hbm [shape: f32[16,128], index: 7, kind: input, shape index: {}]
  %s8 = inlined_call_operand.hbm [shape: f32[16,128], index: 8, kind: output, shape index: {}]
  %s9 = sld [smem:[#allocation0]]
  $region105: #{tpu_custom_call.1} parent=0
    _
  %s11 = ssub.s32 1, %s9
  %s12 = scalar_select 0, %s11, %s9
  $region1: #{tpu_custom_call.1} parent=0
    #allocation3 [shape = 'u8[24576]{0}', space=vmem, size = 0x6000, scoped, tag = 'input window, operand 0']
    #allocation4 [shape = 's32[2]{0}', space=sflag, size = 0x8, scoped, tag = 'scoped memory for tpu_custom_call.1']
    #allocation5 [shape = 's32[2]{0}', space=sflag, size = 0x8, scoped, tag = 'scoped memory for tpu_custom_call.1']
    #allocation6 [shape = 'u8[24576]{0}', space=vmem, size = 0x6000, scoped, tag = 'input window, operand 1']
    #allocation7 [shape = 's32[2]{0}', space=sflag, size = 0x8, scoped, tag = 'scoped memory for tpu_custom_call.1']
    #allocation8 [shape = 'u8[24576]{0}', space=vmem, size = 0x6000, scoped, tag = 'input window, operand 2']
    #allocation9 [shape = 'u8[16384]{0}', space=vmem, size = 0x4000, scoped, tag = 'input window, operand 3']
    #allocation10 [shape = 's32[2]{0}', space=sflag, size = 0x8, scoped, tag = 'scoped memory for tpu_custom_call.1']
    #allocation11 [shape = 'u8[16384]{0}', space=vmem, size = 0x4000, scoped, tag = 'input window, operand 4']
    #allocation12 [shape = 'u8[16384]{0}', space=vmem, size = 0x4000, scoped, tag = 'input window, operand 5']
    #allocation13 [shape = 's32[2]{0}', space=sflag, size = 0x8, scoped, tag = 'scoped memory for tpu_custom_call.1']
    #allocation14 [shape = 'u8[24576]{0}', space=vmem, size = 0x6000, scoped, tag = 'input window, operand 6']
    #allocation15 [shape = 'u8[8192]{0}', space=vmem, size = 0x2000, scoped, tag = 'input window, operand 7']
    #allocation16 [shape = 's32[2]{0}', space=sflag, size = 0x8, scoped, tag = 'scoped memory for tpu_custom_call.1']
    #allocation17 [shape = 'u8[8192]{0}', space=vmem, size = 0x2000, scoped, tag = 'output window, operand 0']
    %13 = vsyncpa [#allocation4], 0
    %s14 = scalar_lea.sflag [#allocation4], 1
    %15 = vsyncpa %s14, 0
    %16 = vsyncpa [#allocation7], 0
    %s17 = scalar_lea.sflag [#allocation7], 1
    %18 = vsyncpa %s17, 0
    %19 = vsyncpa [#allocation10], 0
    %s20 = scalar_lea.sflag [#allocation10], 1
    %21 = vsyncpa %s20, 0
    %22 = vsyncpa [#allocation13], 0
    %s23 = scalar_lea.sflag [#allocation13], 1
    %24 = vsyncpa %s23, 0
    %25 = vsyncpa [#allocation16], 0
    %s26 = scalar_lea.sflag [#allocation16], 1
    %27 = vsyncpa %s26, 0
    %28 = vsyncpa [#allocation5], 0
    %s29 = scalar_lea.sflag [#allocation5], 1
    %30 = vsyncpa %s29, 0
    loop: start=0, step=1, limit=4
    $region2: #{tpu_custom_call.1} parent=1 // loop_pre_header
      _
    $region3: #{tpu_custom_call.1} parent=1 // loop_header
      %s32 = sphi 0, %s36
      %p33 = scmp.ge.s32.totalorder %s32, 4
      %s39 = sphi 0, %s51
      %s40 = sphi 0, %s47
      %s41 = sphi 0, %s39
      %s42 = sphi 0, %s40
      %s43 = sphi 0, %s41
      %s44 = sphi 0, %s42
      %s56 = sphi 0, %s58
      %s59 = sphi 0, %s56
      %s60 = sphi 0, %s59
      %s76 = sphi 0, %s60
      %s84 = sphi 0, %s86
      %s87 = sphi 0, %s84
      %s88 = sphi 0, %s87
      %s104 = sphi 0, %s88
      %s112 = sphi 0, %s114
      %s115 = sphi 0, %s112
      %s116 = sphi 0, %s115
      %s132 = sphi 0, %s116
      %s140 = sphi 0, %s142
      %s143 = sphi 0, %s140
      %s144 = sphi 0, %s143
      %s160 = sphi 0, %s144
      %s168 = sphi 0, %s170
      %s171 = sphi 0, %s168
      %s172 = sphi 0, %s171
      %s188 = sphi 0, %s172
      %s196 = sphi 0, %s198
      %s199 = sphi 0, %s196
      %s200 = sphi 0, %s199
      %s216 = sphi 0, %s200
      %s224 = sphi 0, %s226
      %s227 = sphi 0, %s224
      %s228 = sphi 0, %s227
      %s244 = sphi 0, %s228
      %s252 = sphi 0, %s254
      %s255 = sphi 0, %s252
      %s256 = sphi 0, %s255
      %s272 = sphi 0, %s256
      %s278 = sphi 0, %s280
      %s281 = sphi 0, %s278
      %s282 = sphi 0, %s281
      %s298 = sphi 0, %s282
    $region4: #{tpu_custom_call.1} parent=1 // loop_header_branch
      %35 = sbr.rel (%p33) target = $region8
    $region5: #{tpu_custom_call.1} parent=1 // loop_body
      %s37 = ssub.s32 %s32, 1
      %s38 = ssub.s32 %s32, 2
      %s45 = sadd.s32 1, %s40
      %p46 = scmp.ge.s32.totalorder %s45, 1
      %s47 = scalar_select %p46, 0, %s45
      %s48 = sadd.s32 1, %s39
      %s49 = scalar_select %p46, %s48, %s39
      %p50 = scmp.ge.s32.totalorder %s49, 2
      %s51 = scalar_select %p50, 0, %s49
      %s52 = sadd.s32 %s39, %s40
      %s53 = sadd.s32 %s51, %s47
      %s54 = ssub.s32 %s52, %s53
      %p55 = scmp.eq.s32.totalorder %s54, 0
      %s57 = sadd.s32 %s56, 1
      %s58 = scalar_select %p55, %s56, %s57
      %p61 = pneg %p55
      %p62 = scmp.eq.s32.totalorder %s32, 1
      %p63 = por %p61, %p62
      %p64 = scmp.ne.s32.totalorder %s56, %s59
      %p65 = scmp.eq.s32.totalorder %s32, 0
      %p66 = por %p64, %p65
      %p67 = scmp.ne.s32.totalorder %s56, %s59
      %p68 = scmp.eq.s32.totalorder %s37, 1
      %p69 = por %p67, %p68
      %p70 = scmp.ne.s32.totalorder %s59, %s60
      %p71 = scmp.eq.s32.totalorder %s37, 0
      %p72 = por %p70, %p71
      %p73 = scmp.ne.s32.totalorder %s59, %s60
      %p74 = scmp.eq.s32.totalorder %s38, 1
      %p75 = por %p73, %p74
      %p77 = scmp.ne.s32.totalorder %s60, %s76
      %p78 = scmp.eq.s32.totalorder %s38, 0
      %p79 = por %p77, %p78
      %s80 = sadd.s32 %s39, %s40
      %s81 = sadd.s32 %s51, %s47
      %s82 = ssub.s32 %s80, %s81
      %p83 = scmp.eq.s32.totalorder %s82, 0
      %s85 = sadd.s32 %s84, 1
      %s86 = scalar_select %p83, %s84, %s85
      %p89 = pneg %p83
      %p90 = scmp.eq.s32.totalorder %s32, 1
      %p91 = por %p89, %p90
      %p92 = scmp.ne.s32.totalorder %s84, %s87
      %p93 = scmp.eq.s32.totalorder %s32, 0
      %p94 = por %p92, %p93
      %p95 = scmp.ne.s32.totalorder %s84, %s87
      %p96 = scmp.eq.s32.totalorder %s37, 1
      %p97 = por %p95, %p96
      %p98 = scmp.ne.s32.totalorder %s87, %s88
      %p99 = scmp.eq.s32.totalorder %s37, 0
      %p100 = por %p98, %p99
      %p101 = scmp.ne.s32.totalorder %s87, %s88
      %p102 = scmp.eq.s32.totalorder %s38, 1
      %p103 = por %p101, %p102
      %p105 = scmp.ne.s32.totalorder %s88, %s104
      %p106 = scmp.eq.s32.totalorder %s38, 0
      %p107 = por %p105, %p106
      %s108 = sadd.s32 %s39, %s40
      %s109 = sadd.s32 %s51, %s47
      %s110 = ssub.s32 %s108, %s109
      %p111 = scmp.eq.s32.totalorder %s110, 0
      %s113 = sadd.s32 %s112, 1
      %s114 = scalar_select %p111, %s112, %s113
      %p117 = pneg %p111
      %p118 = scmp.eq.s32.totalorder %s32, 1
      %p119 = por %p117, %p118
      %p120 = scmp.ne.s32.totalorder %s112, %s115
      %p121 = scmp.eq.s32.totalorder %s32, 0
      %p122 = por %p120, %p121
      %p123 = scmp.ne.s32.totalorder %s112, %s115
      %p124 = scmp.eq.s32.totalorder %s37, 1
      %p125 = por %p123, %p124
      %p126 = scmp.ne.s32.totalorder %s115, %s116
      %p127 = scmp.eq.s32.totalorder %s37, 0
      %p128 = por %p126, %p127
      %p129 = scmp.ne.s32.totalorder %s115, %s116
      %p130 = scmp.eq.s32.totalorder %s38, 1
      %p131 = por %p129, %p130
      %p133 = scmp.ne.s32.totalorder %s116, %s132
      %p134 = scmp.eq.s32.totalorder %s38, 0
      %p135 = por %p133, %p134
      %s136 = sadd.s32 %s39, %s40
      %s137 = sadd.s32 %s51, %s47
      %s138 = ssub.s32 %s136, %s137
      %p139 = scmp.eq.s32.totalorder %s138, 0
      %s141 = sadd.s32 %s140, 1
      %s142 = scalar_select %p139, %s140, %s141
      %p145 = pneg %p139
      %p146 = scmp.eq.s32.totalorder %s32, 1
      %p147 = por %p145, %p146
      %p148 = scmp.ne.s32.totalorder %s140, %s143
      %p149 = scmp.eq.s32.totalorder %s32, 0
      %p150 = por %p148, %p149
      %p151 = scmp.ne.s32.totalorder %s140, %s143
      %p152 = scmp.eq.s32.totalorder %s37, 1
      %p153 = por %p151, %p152
      %p154 = scmp.ne.s32.totalorder %s143, %s144
      %p155 = scmp.eq.s32.totalorder %s37, 0
      %p156 = por %p154, %p155
      %p157 = scmp.ne.s32.totalorder %s143, %s144
      %p158 = scmp.eq.s32.totalorder %s38, 1
      %p159 = por %p157, %p158
      %p161 = scmp.ne.s32.totalorder %s144, %s160
      %p162 = scmp.eq.s32.totalorder %s38, 0
      %p163 = por %p161, %p162
      %s164 = sadd.s32 %s39, %s40
      %s165 = sadd.s32 %s51, %s47
      %s166 = ssub.s32 %s164, %s165
      %p167 = scmp.eq.s32.totalorder %s166, 0
      %s169 = sadd.s32 %s168, 1
      %s170 = scalar_select %p167, %s168, %s169
      %p173 = pneg %p167
      %p174 = scmp.eq.s32.totalorder %s32, 1
      %p175 = por %p173, %p174
      %p176 = scmp.ne.s32.totalorder %s168, %s171
      %p177 = scmp.eq.s32.totalorder %s32, 0
      %p178 = por %p176, %p177
      %p179 = scmp.ne.s32.totalorder %s168, %s171
      %p180 = scmp.eq.s32.totalorder %s37, 1
      %p181 = por %p179, %p180
      %p182 = scmp.ne.s32.totalorder %s171, %s172
      %p183 = scmp.eq.s32.totalorder %s37, 0
      %p184 = por %p182, %p183
      %p185 = scmp.ne.s32.totalorder %s171, %s172
      %p186 = scmp.eq.s32.totalorder %s38, 1
      %p187 = por %p185, %p186
      %p189 = scmp.ne.s32.totalorder %s172, %s188
      %p190 = scmp.eq.s32.totalorder %s38, 0
      %p191 = por %p189, %p190
      %s192 = sadd.s32 %s39, %s40
      %s193 = sadd.s32 %s51, %s47
      %s194 = ssub.s32 %s192, %s193
      %p195 = scmp.eq.s32.totalorder %s194, 0
      %s197 = sadd.s32 %s196, 1
      %s198 = scalar_select %p195, %s196, %s197
      %p201 = pneg %p195
      %p202 = scmp.eq.s32.totalorder %s32, 1
      %p203 = por %p201, %p202
      %p204 = scmp.ne.s32.totalorder %s196, %s199
      %p205 = scmp.eq.s32.totalorder %s32, 0
      %p206 = por %p204, %p205
      %p207 = scmp.ne.s32.totalorder %s196, %s199
      %p208 = scmp.eq.s32.totalorder %s37, 1
      %p209 = por %p207, %p208
      %p210 = scmp.ne.s32.totalorder %s199, %s200
      %p211 = scmp.eq.s32.totalorder %s37, 0
      %p212 = por %p210, %p211
      %p213 = scmp.ne.s32.totalorder %s199, %s200
      %p214 = scmp.eq.s32.totalorder %s38, 1
      %p215 = por %p213, %p214
      %p217 = scmp.ne.s32.totalorder %s200, %s216
      %p218 = scmp.eq.s32.totalorder %s38, 0
      %p219 = por %p217, %p218
      %s220 = sadd.s32 %s39, %s40
      %s221 = sadd.s32 %s51, %s47
      %s222 = ssub.s32 %s220, %s221
      %p223 = scmp.eq.s32.totalorder %s222, 0
      %s225 = sadd.s32 %s224, 1
      %s226 = scalar_select %p223, %s224, %s225
      %p229 = pneg %p223
      %p230 = scmp.eq.s32.totalorder %s32, 1
      %p231 = por %p229, %p230
      %p232 = scmp.ne.s32.totalorder %s224, %s227
      %p233 = scmp.eq.s32.totalorder %s32, 0
      %p234 = por %p232, %p233
      %p235 = scmp.ne.s32.totalorder %s224, %s227
      %p236 = scmp.eq.s32.totalorder %s37, 1
      %p237 = por %p235, %p236
      %p238 = scmp.ne.s32.totalorder %s227, %s228
      %p239 = scmp.eq.s32.totalorder %s37, 0
      %p240 = por %p238, %p239
      %p241 = scmp.ne.s32.totalorder %s227, %s228
      %p242 = scmp.eq.s32.totalorder %s38, 1
      %p243 = por %p241, %p242
      %p245 = scmp.ne.s32.totalorder %s228, %s244
      %p246 = scmp.eq.s32.totalorder %s38, 0
      %p247 = por %p245, %p246
      %s248 = sadd.s32 %s39, %s40
      %s249 = sadd.s32 %s51, %s47
      %s250 = ssub.s32 %s248, %s249
      %p251 = scmp.eq.s32.totalorder %s250, 0
      %s253 = sadd.s32 %s252, 1
      %s254 = scalar_select %p251, %s252, %s253
      %p257 = pneg %p251
      %p258 = scmp.eq.s32.totalorder %s32, 1
      %p259 = por %p257, %p258
      %p260 = scmp.ne.s32.totalorder %s252, %s255
      %p261 = scmp.eq.s32.totalorder %s32, 0
      %p262 = por %p260, %p261
      %p263 = scmp.ne.s32.totalorder %s252, %s255
      %p264 = scmp.eq.s32.totalorder %s37, 1
      %p265 = por %p263, %p264
      %p266 = scmp.ne.s32.totalorder %s255, %s256
      %p267 = scmp.eq.s32.totalorder %s37, 0
      %p268 = por %p266, %p267
      %p269 = scmp.ne.s32.totalorder %s255, %s256
      %p270 = scmp.eq.s32.totalorder %s38, 1
      %p271 = por %p269, %p270
      %p273 = scmp.ne.s32.totalorder %s256, %s272
      %p274 = scmp.eq.s32.totalorder %s38, 0
      %p275 = por %p273, %p274
      %s276 = ssub.s32 %s39, %s51
      %p277 = scmp.eq.s32.totalorder %s276, 0
      %s279 = sadd.s32 %s278, 1
      %s280 = scalar_select %p277, %s278, %s279
      %p283 = pneg %p277
      %p284 = scmp.eq.s32.totalorder %s32, 1
      %p285 = por %p283, %p284
      %p286 = scmp.ne.s32.totalorder %s278, %s281
      %p287 = scmp.eq.s32.totalorder %s32, 0
      %p288 = por %p286, %p287
      %p289 = scmp.ne.s32.totalorder %s278, %s281
      %p290 = scmp.eq.s32.totalorder %s37, 1
      %p291 = por %p289, %p290
      %p292 = scmp.ne.s32.totalorder %s281, %s282
      %p293 = scmp.eq.s32.totalorder %s37, 0
      %p294 = por %p292, %p293
      %p295 = scmp.ne.s32.totalorder %s281, %s282
      %p296 = scmp.eq.s32.totalorder %s38, 1
      %p297 = por %p295, %p296
      %p299 = scmp.ne.s32.totalorder %s282, %s298
      %p300 = scmp.eq.s32.totalorder %s38, 0
      %p301 = por %p299, %p300
      %p302 = scmp.le.s32.totalorder 1, %s32
      %p303 = scmp.lt.s32.totalorder %s32, 3
      %p304 = pnand %p302, %p303
      %p305 = pneg %p304
      // Predicated region
      $region9: #{tpu_custom_call.1} parent=5 // pred_check
        _
      $region10: #{tpu_custom_call.1} parent=5 // pred_check_branch
        %307 = sbr.rel (%p304) target = $region12
      $region11: #{tpu_custom_call.1} parent=5 // pred_region
        %s308 = ssub.s32 %s32, 1
      $region12: #{tpu_custom_call.1} parent=5 // pred_fallthru
        _
      %p309 = scmp.lt.s32.totalorder %s32, 2
      // Predicated region
      $region13: #{tpu_custom_call.1} parent=5 // pred_check
        %p310 = pneg %p309
      $region14: #{tpu_custom_call.1} parent=5 // pred_check_branch
        %312 = sbr.rel (%p310) target = $region16
      $region15: #{tpu_custom_call.1} parent=5 // pred_region
        // Predicated region
        $region17: #{tpu_custom_call.1} parent=15 // pred_check
          %p313 = pneg %p66
        $region18: #{tpu_custom_call.1} parent=15 // pred_check_branch
          %315 = sbr.rel (%p313) target = $region20
        $region19: #{tpu_custom_call.1} parent=15 // pred_region
          %s316 = sand.u32 %s56, 1
          %s317 = scalar_lea.sflag [#allocation4], %s316
          %s318 = sand.u32 %s56, 1
          %s319 = smul.addr %s318, 24
          %s320 = scalar_lea.vmem [#allocation3], %s319
          %s321 = sadd.s32 %s39, %s40
          %s323 = ssub.s32 384, 384
          %324 = vsyncadd %s317, %s323
          %s325 = smul.addr %s321, 128
          %s326 = scalar_lea.hbm %s0, %s325
          %s327 = sshll.u32 %s320, 4
          %s328 = int_to_ptr.vmem [resolvable:$true] %s327
          %333 = dma.hbm_to_vmem [thread:$0]  %s326, 384, %s328, %s317, 256, 128, 8
        $region20: #{tpu_custom_call.1} parent=15 // pred_fallthru
          _
        // Predicated region
        $region21: #{tpu_custom_call.1} parent=15 // pred_check
          %p334 = pneg %p94
        $region22: #{tpu_custom_call.1} parent=15 // pred_check_branch
          %336 = sbr.rel (%p334) target = $region24
        $region23: #{tpu_custom_call.1} parent=15 // pred_region
          %s337 = sand.u32 %s32, 1
          %s338 = scalar_lea.sflag [#allocation7], %s337
          %s339 = sand.u32 %s84, 1
          %s340 = smul.addr %s339, 24
          %s341 = scalar_lea.vmem [#allocation6], %s340
          %s342 = sadd.s32 %s39, %s40
          %s344 = ssub.s32 384, 384
          %345 = vsyncadd %s338, %s344
          %s346 = smul.addr %s342, 128
          %s347 = scalar_lea.hbm %s1, %s346
          %s348 = sshll.u32 %s341, 4
          %s349 = int_to_ptr.vmem [resolvable:$true] %s348
          %354 = dma.hbm_to_vmem [thread:$0]  %s347, 384, %s349, %s338, 256, 128, 8
        $region24: #{tpu_custom_call.1} parent=15 // pred_fallthru
          _
        // Predicated region
        $region25: #{tpu_custom_call.1} parent=15 // pred_check
          %p355 = pneg %p122
        $region26: #{tpu_custom_call.1} parent=15 // pred_check_branch
          %357 = sbr.rel (%p355) target = $region28
        $region27: #{tpu_custom_call.1} parent=15 // pred_region
          %s358 = sand.u32 %s32, 1
          %s359 = scalar_lea.sflag [#allocation7], %s358
          %s360 = sand.u32 %s112, 1
          %s361 = smul.addr %s360, 24
          %s362 = scalar_lea.vmem [#allocation8], %s361
          %s363 = sadd.s32 %s39, %s40
          %s365 = ssub.s32 384, 384
          %366 = vsyncadd %s359, %s365
          %s367 = smul.addr %s363, 128
          %s368 = scalar_lea.hbm %s2, %s367
          %s369 = sshll.u32 %s362, 4
          %s370 = int_to_ptr.vmem [resolvable:$true] %s369
          %375 = dma.hbm_to_vmem [thread:$0]  %s368, 384, %s370, %s359, 256, 128, 8
        $region28: #{tpu_custom_call.1} parent=15 // pred_fallthru
          _
        // Predicated region
        $region29: #{tpu_custom_call.1} parent=15 // pred_check
          %p376 = pneg %p150
        $region30: #{tpu_custom_call.1} parent=15 // pred_check_branch
          %378 = sbr.rel (%p376) target = $region32
        $region31: #{tpu_custom_call.1} parent=15 // pred_region
          %s379 = sand.u32 %s32, 1
          %s380 = scalar_lea.sflag [#allocation10], %s379
          %s381 = sand.u32 %s140, 1
          %s382 = smul.addr %s381, 16
          %s383 = scalar_lea.vmem [#allocation9], %s382
          %s384 = sadd.s32 %s39, %s40
          %s386 = ssub.s32 256, 256
          %387 = vsyncadd %s380, %s386
          %s388 = smul.addr %s384, 128
          %s389 = scalar_lea.hbm %s3, %s388
          %s390 = sshll.u32 %s383, 4
          %s391 = int_to_ptr.vmem [resolvable:$true] %s390
          %396 = dma.hbm_to_vmem [thread:$0]  %s389, 256, %s391, %s380, 256, 128, 8
        $region32: #{tpu_custom_call.1} parent=15 // pred_fallthru
          _
        // Predicated region
        $region33: #{tpu_custom_call.1} parent=15 // pred_check
          %p397 = pneg %p178
        $region34: #{tpu_custom_call.1} parent=15 // pred_check_branch
          %399 = sbr.rel (%p397) target = $region36
        $region35: #{tpu_custom_call.1} parent=15 // pred_region
          %s400 = sand.u32 %s32, 1
          %s401 = scalar_lea.sflag [#allocation10], %s400
          %s402 = sand.u32 %s168, 1
          %s403 = smul.addr %s402, 16
          %s404 = scalar_lea.vmem [#allocation11], %s403
          %s405 = sadd.s32 %s39, %s40
          %s407 = ssub.s32 256, 256
          %408 = vsyncadd %s401, %s407
          %s409 = smul.addr %s405, 128
          %s410 = scalar_lea.hbm %s4, %s409
          %s411 = sshll.u32 %s404, 4
          %s412 = int_to_ptr.vmem [resolvable:$true] %s411
          %417 = dma.hbm_to_vmem [thread:$0]  %s410, 256, %s412, %s401, 256, 128, 8
        $region36: #{tpu_custom_call.1} parent=15 // pred_fallthru
          _
        // Predicated region
        $region37: #{tpu_custom_call.1} parent=15 // pred_check
          %p418 = pneg %p206
        $region38: #{tpu_custom_call.1} parent=15 // pred_check_branch
          %420 = sbr.rel (%p418) target = $region40
        $region39: #{tpu_custom_call.1} parent=15 // pred_region
          %s421 = sand.u32 %s32, 1
          %s422 = scalar_lea.sflag [#allocation13], %s421
          %s423 = sand.u32 %s196, 1
          %s424 = smul.addr %s423, 16
          %s425 = scalar_lea.vmem [#allocation12], %s424
          %s426 = sadd.s32 %s39, %s40
          %s428 = ssub.s32 256, 256
          %429 = vsyncadd %s422, %s428
          %s430 = smul.addr %s426, 128
          %s431 = scalar_lea.hbm %s5, %s430
          %s432 = sshll.u32 %s425, 4
          %s433 = int_to_ptr.vmem [resolvable:$true] %s432
          %438 = dma.hbm_to_vmem [thread:$0]  %s431, 256, %s433, %s422, 256, 128, 8
        $region40: #{tpu_custom_call.1} parent=15 // pred_fallthru
          _
        // Predicated region
        $region41: #{tpu_custom_call.1} parent=15 // pred_check
          %p439 = pneg %p234
        $region42: #{tpu_custom_call.1} parent=15 // pred_check_branch
          %441 = sbr.rel (%p439) target = $region44
        $region43: #{tpu_custom_call.1} parent=15 // pred_region
          %s442 = sand.u32 %s32, 1
          %s443 = scalar_lea.sflag [#allocation13], %s442
          %s444 = sand.u32 %s224, 1
          %s445 = smul.addr %s444, 24
          %s446 = scalar_lea.vmem [#allocation14], %s445
          %s447 = sadd.s32 %s39, %s40
          %s449 = ssub.s32 384, 384
          %450 = vsyncadd %s443, %s449
          %s451 = smul.addr %s447, 128
          %s452 = scalar_lea.hbm %s6, %s451
          %s453 = sshll.u32 %s446, 4
          %s454 = int_to_ptr.vmem [resolvable:$true] %s453
          %459 = dma.hbm_to_vmem [thread:$0]  %s452, 384, %s454, %s443, 256, 128, 8
        $region44: #{tpu_custom_call.1} parent=15 // pred_fallthru
          _
        // Predicated region
        $region45: #{tpu_custom_call.1} parent=15 // pred_check
          %p460 = pneg %p262
        $region46: #{tpu_custom_call.1} parent=15 // pred_check_branch
          %462 = sbr.rel (%p460) target = $region48
        $region47: #{tpu_custom_call.1} parent=15 // pred_region
          %s463 = sand.u32 %s252, 1
          %s464 = scalar_lea.sflag [#allocation16], %s463
          %s465 = sand.u32 %s252, 1
          %s466 = smul.addr %s465, 8
          %s467 = scalar_lea.vmem [#allocation15], %s466
          %s468 = sadd.s32 %s39, %s40
          %s470 = ssub.s32 128, 128
          %471 = vsyncadd %s464, %s470
          %s472 = smul.addr %s468, 128
          %s473 = scalar_lea.hbm %s7, %s472
          %s475 = sshll.u32 %s467, 4
          %s476 = int_to_ptr.vmem [resolvable:$true] %s475
          %478 = dma.hbm_to_vmem [thread:$0]  %s473, 128, %s476, %s464
        $region48: #{tpu_custom_call.1} parent=15 // pred_fallthru
          _
      $region16: #{tpu_custom_call.1} parent=5 // pred_fallthru
        _
      %p479 = scmp.le.s32.totalorder 1, %s32
      %p480 = scmp.lt.s32.totalorder %s32, 3
      %p481 = pnand %p479, %p480
      %p482 = pneg %p481
      // Predicated region
      $region49: #{tpu_custom_call.1} parent=5 // pred_check
        _
      $region50: #{tpu_custom_call.1} parent=5 // pred_check_branch
        %484 = sbr.rel (%p481) target = $region52
      $region51: #{tpu_custom_call.1} parent=5 // pred_region
        %s485 = ssub.s32 %s32, 1
        %s486 = sand.u32 %s59, 1
        %s487 = scalar_lea.sflag [#allocation4], %s486
        %s488 = sand.u32 %s59, 1
        %s489 = smul.addr %s488, 24
        %s490 = scalar_lea.vmem [#allocation3], %s489
        // Predicated region
        $region53: #{tpu_custom_call.1} parent=51 // pred_check
          %p491 = pneg %p72
        $region54: #{tpu_custom_call.1} parent=51 // pred_check_branch
          %493 = sbr.rel (%p491) target = $region56
        $region55: #{tpu_custom_call.1} parent=51 // pred_region
          %494 = dma.done %s487, 384
        $region56: #{tpu_custom_call.1} parent=51 // pred_fallthru
          _
        %s495 = sand.u32 %s37, 1
        %s496 = scalar_lea.sflag [#allocation7], %s495
        %s497 = sand.u32 %s87, 1
        %s498 = smul.addr %s497, 24
        %s499 = scalar_lea.vmem [#allocation6], %s498
        // Predicated region
        $region57: #{tpu_custom_call.1} parent=51 // pred_check
          %p500 = pneg %p100
        $region58: #{tpu_custom_call.1} parent=51 // pred_check_branch
          %502 = sbr.rel (%p500) target = $region60
        $region59: #{tpu_custom_call.1} parent=51 // pred_region
          %503 = dma.done %s496, 384
        $region60: #{tpu_custom_call.1} parent=51 // pred_fallthru
          _
        %s504 = sand.u32 %s37, 1
        %s505 = scalar_lea.sflag [#allocation7], %s504
        %s506 = sand.u32 %s115, 1
        %s507 = smul.addr %s506, 24
        %s508 = scalar_lea.vmem [#allocation8], %s507
        // Predicated region
        $region61: #{tpu_custom_call.1} parent=51 // pred_check
          %p509 = pneg %p128
        $region62: #{tpu_custom_call.1} parent=51 // pred_check_branch
          %511 = sbr.rel (%p509) target = $region64
        $region63: #{tpu_custom_call.1} parent=51 // pred_region
          %512 = dma.done %s505, 384
        $region64: #{tpu_custom_call.1} parent=51 // pred_fallthru
          _
        %s513 = sand.u32 %s37, 1
        %s514 = scalar_lea.sflag [#allocation10], %s513
        %s515 = sand.u32 %s143, 1
        %s516 = smul.addr %s515, 16
        %s517 = scalar_lea.vmem [#allocation9], %s516
        // Predicated region
        $region65: #{tpu_custom_call.1} parent=51 // pred_check
          %p518 = pneg %p156
        $region66: #{tpu_custom_call.1} parent=51 // pred_check_branch
          %520 = sbr.rel (%p518) target = $region68
        $region67: #{tpu_custom_call.1} parent=51 // pred_region
          %521 = dma.done %s514, 256
        $region68: #{tpu_custom_call.1} parent=51 // pred_fallthru
          _
        %s522 = sand.u32 %s37, 1
        %s523 = scalar_lea.sflag [#allocation10], %s522
        %s524 = sand.u32 %s171, 1
        %s525 = smul.addr %s524, 16
        %s526 = scalar_lea.vmem [#allocation11], %s525
        // Predicated region
        $region69: #{tpu_custom_call.1} parent=51 // pred_check
          %p527 = pneg %p184
        $region70: #{tpu_custom_call.1} parent=51 // pred_check_branch
          %529 = sbr.rel (%p527) target = $region72
        $region71: #{tpu_custom_call.1} parent=51 // pred_region
          %530 = dma.done %s523, 256
        $region72: #{tpu_custom_call.1} parent=51 // pred_fallthru
          _
        %s531 = sand.u32 %s37, 1
        %s532 = scalar_lea.sflag [#allocation13], %s531
        %s533 = sand.u32 %s199, 1
        %s534 = smul.addr %s533, 16
        %s535 = scalar_lea.vmem [#allocation12], %s534
        // Predicated region
        $region73: #{tpu_custom_call.1} parent=51 // pred_check
          %p536 = pneg %p212
        $region74: #{tpu_custom_call.1} parent=51 // pred_check_branch
          %538 = sbr.rel (%p536) target = $region76
        $region75: #{tpu_custom_call.1} parent=51 // pred_region
          %539 = dma.done %s532, 256
        $region76: #{tpu_custom_call.1} parent=51 // pred_fallthru
          _
        %s540 = sand.u32 %s37, 1
        %s541 = scalar_lea.sflag [#allocation13], %s540
        %s542 = sand.u32 %s227, 1
        %s543 = smul.addr %s542, 24
        %s544 = scalar_lea.vmem [#allocation14], %s543
        // Predicated region
        $region77: #{tpu_custom_call.1} parent=51 // pred_check
          %p545 = pneg %p240
        $region78: #{tpu_custom_call.1} parent=51 // pred_check_branch
          %547 = sbr.rel (%p545) target = $region80
        $region79: #{tpu_custom_call.1} parent=51 // pred_region
          %548 = dma.done %s541, 384
        $region80: #{tpu_custom_call.1} parent=51 // pred_fallthru
          _
        %s549 = sand.u32 %s255, 1
        %s550 = scalar_lea.sflag [#allocation16], %s549
        %s551 = sand.u32 %s255, 1
        %s552 = smul.addr %s551, 8
        %s553 = scalar_lea.vmem [#allocation15], %s552
        // Predicated region
        $region81: #{tpu_custom_call.1} parent=51 // pred_check
          %p554 = pneg %p268
        $region82: #{tpu_custom_call.1} parent=51 // pred_check_branch
          %556 = sbr.rel (%p554) target = $region84
        $region83: #{tpu_custom_call.1} parent=51 // pred_region
          %557 = dma.done %s550, 128
        $region84: #{tpu_custom_call.1} parent=51 // pred_fallthru
          _
        %s558 = sand.u32 %s59, 1
        %s559 = scalar_lea.sflag [#allocation4], %s558
        %s560 = sand.u32 %s59, 1
        %s561 = smul.addr %s560, 24
        %s562 = scalar_lea.vmem [#allocation3], %s561
        %p563 = pneg %p72
        %p564 = pneg %p69
        %s565 = sand.u32 %s37, 1
        %s566 = scalar_lea.sflag [#allocation7], %s565
        %s567 = sand.u32 %s87, 1
        %s568 = smul.addr %s567, 24
        %s569 = scalar_lea.vmem [#allocation6], %s568
        %p570 = pneg %p100
        %p571 = pneg %p97
        %s572 = sand.u32 %s37, 1
        %s573 = scalar_lea.sflag [#allocation7], %s572
        %s574 = sand.u32 %s115, 1
        %s575 = smul.addr %s574, 24
        %s576 = scalar_lea.vmem [#allocation8], %s575
        %p577 = pneg %p128
        %p578 = pneg %p125
        %s579 = sand.u32 %s37, 1
        %s580 = scalar_lea.sflag [#allocation10], %s579
        %s581 = sand.u32 %s143, 1
        %s582 = smul.addr %s581, 16
        %s583 = scalar_lea.vmem [#allocation9], %s582
        %p584 = pneg %p156
        %p585 = pneg %p153
        %s586 = sand.u32 %s37, 1
        %s587 = scalar_lea.sflag [#allocation10], %s586
        %s588 = sand.u32 %s171, 1
        %s589 = smul.addr %s588, 16
        %s590 = scalar_lea.vmem [#allocation11], %s589
        %p591 = pneg %p184
        %p592 = pneg %p181
        %s593 = sand.u32 %s37, 1
        %s594 = scalar_lea.sflag [#allocation13], %s593
        %s595 = sand.u32 %s199, 1
        %s596 = smul.addr %s595, 16
        %s597 = scalar_lea.vmem [#allocation12], %s596
        %p598 = pneg %p212
        %p599 = pneg %p209
        %s600 = sand.u32 %s37, 1
        %s601 = scalar_lea.sflag [#allocation13], %s600
        %s602 = sand.u32 %s227, 1
        %s603 = smul.addr %s602, 24
        %s604 = scalar_lea.vmem [#allocation14], %s603
        %p605 = pneg %p240
        %p606 = pneg %p237
        %s607 = sand.u32 %s255, 1
        %s608 = scalar_lea.sflag [#allocation16], %s607
        %s609 = sand.u32 %s255, 1
        %s610 = smul.addr %s609, 8
        %s611 = scalar_lea.vmem [#allocation15], %s610
        %p612 = pneg %p268
        %p613 = pneg %p265
        %p614 = pneg %p294
        %p615 = pneg %p291
        %s616 = sand.u32 %s281, 1
        %s617 = scalar_lea.sflag [#allocation5], %s616
        %s618 = sand.u32 %s281, 1
        %s619 = smul.addr %s618, 8
        %s620 = scalar_lea.vmem [#allocation17], %s619
        %s621 = sadd.s32 %s41, %s42
        %s622 = sadd.s32 %s41, %s42
        %s623 = sadd.s32 %s41, %s42
        %s624 = sadd.s32 %s41, %s42
        %s625 = sadd.s32 %s41, %s42
        %s626 = sadd.s32 %s41, %s42
        %s627 = sadd.s32 %s41, %s42
        %s628 = sadd.s32 %s41, %s42
        %p629 = scmp.eq.s32.totalorder %s42, 0
        // Predicated region
        $region85: #{tpu_custom_call.1} parent=51 // pred_check
          %p630 = pneg %p629
        $region86: #{tpu_custom_call.1} parent=51 // pred_check_branch
          %632 = sbr.rel (%p630) target = $region88
        $region87: #{tpu_custom_call.1} parent=51 // pred_region
          %633 = vst [vmem:[#allocation2] sm:$0xff] 0.0
        $region88: #{tpu_custom_call.1} parent=51 // pred_fallthru
          _
        %v634 = vld [vmem:[%s544] sm:$0xff]
        %s635 = scalar_lea.vmem %s544, 8 [#allocation14]
        %v636 = vld [vmem:[%s635] sm:$0xff]
        %s637 = scalar_lea.vmem %s544, 16 [#allocation14]
        %v638 = vld [vmem:[%s637] sm:$0xff]
        %v639 = vld [vmem:[%s553] sm:$0xff]
        %v640 = vld [vmem:[%s490] sm:$0xff]
        %s641 = scalar_lea.vmem %s490, 8 [#allocation3]
        %v642 = vld [vmem:[%s641] sm:$0xff]
        %s643 = scalar_lea.vmem %s490, 16 [#allocation3]
        %v644 = vld [vmem:[%s643] sm:$0xff]
        %v645 = vld [vmem:[%s517] sm:$0xff]
        %s646 = scalar_lea.vmem %s517, 8 [#allocation9]
        %v647 = vld [vmem:[%s646] sm:$0xff]
        %v648 = vsub.f32 %v640, %v634
        %v649 = vand.u32 2147483647, %v648
        %v650 = vsub.f32 %v642, %v636
        %v651 = vand.u32 2147483647, %v650
        %v652 = vadd.f32 %v649, %v651
        %v653 = vsub.f32 %v644, %v638
        %v654 = vand.u32 2147483647, %v653
        %v655 = vsub.f32 %v645, %v634
        %v656 = vand.u32 2147483647, %v655
        %v657 = vsub.f32 %v647, %v636
        %v658 = vand.u32 2147483647, %v657
        %v659 = vadd.f32 %v656, %v658
        %v660 = vmul.f32 %v652, 0.0007910156
        %v661 = vmul.f32 %v654, 0.33222657
        %v662 = vadd.f32 %v660, %v661
        %v663 = vmul.f32 %v659, 0.00015820313
        %v664 = vadd.f32 %v662, %v663
        %v665 = vadd.f32 %v664, 0.0
        %v666 = vld [vmem:[%s499] sm:$0xff]
        %s667 = scalar_lea.vmem %s499, 8 [#allocation6]
        %v668 = vld [vmem:[%s667] sm:$0xff]
        %s669 = scalar_lea.vmem %s499, 16 [#allocation6]
        %v670 = vld [vmem:[%s669] sm:$0xff]
        %v671 = vld [vmem:[%s526] sm:$0xff]
        %s672 = scalar_lea.vmem %s526, 8 [#allocation11]
        %v673 = vld [vmem:[%s672] sm:$0xff]
        %v674 = vsub.f32 %v666, %v634
        %v675 = vand.u32 2147483647, %v674
        %v676 = vsub.f32 %v668, %v636
        %v677 = vand.u32 2147483647, %v676
        %v678 = vadd.f32 %v675, %v677
        %v679 = vsub.f32 %v670, %v638
        %v680 = vand.u32 2147483647, %v679
        %v681 = vsub.f32 %v671, %v634
        %v682 = vand.u32 2147483647, %v681
        %v683 = vsub.f32 %v673, %v636
        %v684 = vand.u32 2147483647, %v683
        %v685 = vadd.f32 %v682, %v684
        %v686 = vmul.f32 %v678, 0.0008789062
        %v687 = vmul.f32 %v680, 0.36914063
        %v688 = vadd.f32 %v686, %v687
        %v689 = vmul.f32 %v685, 0.00017578126
        %v690 = vadd.f32 %v688, %v689
        %v691 = vadd.f32 %v665, %v690
        %v692 = vld [vmem:[%s508] sm:$0xff]
        %s693 = scalar_lea.vmem %s508, 8 [#allocation8]
        %v694 = vld [vmem:[%s693] sm:$0xff]
        %s695 = scalar_lea.vmem %s508, 16 [#allocation8]
        %v696 = vld [vmem:[%s695] sm:$0xff]
        %v697 = vld [vmem:[%s535] sm:$0xff]
        %s698 = scalar_lea.vmem %s535, 8 [#allocation12]
        %v699 = vld [vmem:[%s698] sm:$0xff]
        %v700 = vsub.f32 %v692, %v634
        %v701 = vand.u32 2147483647, %v700
        %v702 = vsub.f32 %v694, %v636
        %v703 = vand.u32 2147483647, %v702
        %v704 = vadd.f32 %v701, %v703
        %v705 = vsub.f32 %v696, %v638
        %v706 = vand.u32 2147483647, %v705
        %v707 = vsub.f32 %v697, %v634
        %v708 = vand.u32 2147483647, %v707
        %v709 = vsub.f32 %v699, %v636
        %v710 = vand.u32 2147483647, %v709
        %v711 = vadd.f32 %v708, %v710
        %v712 = vmul.f32 %v704, 0.0009765625
        %v713 = vmul.f32 %v706, 0.41015625
        %v714 = vadd.f32 %v712, %v713
        %v715 = vmul.f32 %v711, 0.0001953125
        %v716 = vadd.f32 %v714, %v715
        %v717 = vadd.f32 %v691, %v716
        %v718 = vmul.f32 %v700, %v700
        %v719 = vmul.f32 %v702, %v702
        %v720 = vadd.f32 %v718, %v719
        %v721 = vrsqrt.pop %v720
        %v722 = vmul.f32 %v720, %v721
        %vm723 = vcmp.eq.f32.partialorder %v720, inf
        %v724 = vsel %vm723, %v720, %v722
        %vm725 = vcmp.eq.f32.partialorder %v720, 0.0
        %v726 = vand.u32 %v720, 2147483648
        %v727 = vsel %vm725, %v726, %v724
        %v728 = vmul.f32 %v639, %v717
        %v729 = vmul.f32 %v639, %v727
        %v730 = vmul.f32 %v639, %v706
        %vm731 = vcmp.lt.f32.partialorder %v727, 1.0
        %v732 = vsel %vm731, 1, 0
        %v733 = vcvt.s32.f32 %v732
        %v734 = vmul.f32 %v639, %v733
        %vm735 = vcmp.lt.f32.partialorder %v727, 3.0
        %v736 = vsel %vm735, 1, 0
        %v737 = vcvt.s32.f32 %v736
        %v738 = vmul.f32 %v639, %v737
        %vm739 = vcmp.lt.f32.partialorder %v727, 5.0
        %v740 = vsel %vm739, 1, 0
        %v741 = vcvt.s32.f32 %v740
        %v742 = vmul.f32 %v639, %v741
        %v743 = vld [vmem:[#allocation2] sm:$0x1]
        %v744 = vrot.slane %v728, 4
        %v745 = vadd.f32 %v728, %v744
        %v746 = vrot.slane %v745, 2
        %v747 = vadd.f32 %v745, %v746
        %v748 = vrot.slane %v747, 1
        %v749 = vadd.f32 %v747, %v748
        %v750 = vadd.f32 %v743, %v749
        %751 = vst [vmem:[#allocation2] sm:$0x1] %v750
        %v752 = vld [vmem:[#allocation2 + $0x1] sm:$0x1]
        %v753 = vrot.slane %v729, 4
        %v754 = vadd.f32 %v729, %v753
        %v755 = vrot.slane %v754, 2
        %v756 = vadd.f32 %v754, %v755
        %v757 = vrot.slane %v756, 1
        %v758 = vadd.f32 %v756, %v757
        %v759 = vadd.f32 %v752, %v758
        %760 = vst [vmem:[#allocation2 + $0x1] sm:$0x1] %v759
        %v761 = vld [vmem:[#allocation2 + $0x2] sm:$0x1]
        %v762 = vrot.slane %v730, 4
        %v763 = vadd.f32 %v730, %v762
        %v764 = vrot.slane %v763, 2
        %v765 = vadd.f32 %v763, %v764
        %v766 = vrot.slane %v765, 1
        %v767 = vadd.f32 %v765, %v766
        %v768 = vadd.f32 %v761, %v767
        %769 = vst [vmem:[#allocation2 + $0x2] sm:$0x1] %v768
        %v770 = vld [vmem:[#allocation2 + $0x3] sm:$0x1]
        %v771 = vrot.slane %v639, 4
        %v772 = vadd.f32 %v639, %v771
        %v773 = vrot.slane %v772, 2
        %v774 = vadd.f32 %v772, %v773
        %v775 = vrot.slane %v774, 1
        %v776 = vadd.f32 %v774, %v775
        %v777 = vadd.f32 %v770, %v776
        %778 = vst [vmem:[#allocation2 + $0x3] sm:$0x1] %v777
        %v779 = vld [vmem:[#allocation2 + $0x4] sm:$0x1]
        %v780 = vrot.slane %v734, 4
        %v781 = vadd.f32 %v734, %v780
        %v782 = vrot.slane %v781, 2
        %v783 = vadd.f32 %v781, %v782
        %v784 = vrot.slane %v783, 1
        %v785 = vadd.f32 %v783, %v784
        %v786 = vadd.f32 %v779, %v785
        %787 = vst [vmem:[#allocation2 + $0x4] sm:$0x1] %v786
        %v788 = vld [vmem:[#allocation2 + $0x5] sm:$0x1]
        %v789 = vrot.slane %v738, 4
        %v790 = vadd.f32 %v738, %v789
        %v791 = vrot.slane %v790, 2
        %v792 = vadd.f32 %v790, %v791
        %v793 = vrot.slane %v792, 1
        %v794 = vadd.f32 %v792, %v793
        %v795 = vadd.f32 %v788, %v794
        %796 = vst [vmem:[#allocation2 + $0x5] sm:$0x1] %v795
        %v797 = vld [vmem:[#allocation2 + $0x6] sm:$0x1]
        %v798 = vrot.slane %v742, 4
        %v799 = vadd.f32 %v742, %v798
        %v800 = vrot.slane %v799, 2
        %v801 = vadd.f32 %v799, %v800
        %v802 = vrot.slane %v801, 1
        %v803 = vadd.f32 %v801, %v802
        %v804 = vadd.f32 %v797, %v803
        %805 = vst [vmem:[#allocation2 + $0x6] sm:$0x1] %v804
        // Predicated region
        $region89: #{tpu_custom_call.1} parent=51 // pred_check
          %p806 = pneg %p629
        $region90: #{tpu_custom_call.1} parent=51 // pred_check_branch
          %808 = sbr.rel (%p806) target = $region92
        $region91: #{tpu_custom_call.1} parent=51 // pred_region
          %v809 = vld [vmem:[#allocation2] sm:$0xff]
          %810 = vst [vmem:[%s620] sm:$0xff] %v809
        $region92: #{tpu_custom_call.1} parent=51 // pred_fallthru
          _
        %s811 = sand.u32 %s281, 1
        %s812 = scalar_lea.sflag [#allocation5], %s811
        %s813 = sand.u32 %s281, 1
        %s814 = smul.addr %s813, 8
        %s815 = scalar_lea.vmem [#allocation17], %s814
        // Predicated region
        $region93: #{tpu_custom_call.1} parent=51 // pred_check
          %p816 = pneg %p291
        $region94: #{tpu_custom_call.1} parent=51 // pred_check_branch
          %818 = sbr.rel (%p816) target = $region96
        $region95: #{tpu_custom_call.1} parent=51 // pred_region
          %s820 = ssub.s32 128, 128
          %821 = vsyncadd %s812, %s820
          %s822 = smul.addr %s41, 128
          %s823 = scalar_lea.hbm %s8, %s822
          %s825 = sshll.u32 %s815, 4
          %s826 = int_to_ptr.vmem [resolvable:$true] %s825
          %828 = dma.vmem_to_hbm [thread:$0]  %s826, 128, %s823, %s812
        $region96: #{tpu_custom_call.1} parent=51 // pred_fallthru
          _
      $region52: #{tpu_custom_call.1} parent=5 // pred_fallthru
        _
      %p829 = scmp.le.s32.totalorder 2, %s32
      // Predicated region
      $region97: #{tpu_custom_call.1} parent=5 // pred_check
        %p830 = pneg %p829
      $region98: #{tpu_custom_call.1} parent=5 // pred_check_branch
        %832 = sbr.rel (%p830) target = $region100
      $region99: #{tpu_custom_call.1} parent=5 // pred_region
        %s833 = ssub.s32 %s32, 2
        // Predicated region
        $region101: #{tpu_custom_call.1} parent=99 // pred_check
          %p834 = pneg %p297
        $region102: #{tpu_custom_call.1} parent=99 // pred_check_branch
          %836 = sbr.rel (%p834) target = $region104
        $region103: #{tpu_custom_call.1} parent=99 // pred_region
          %s837 = sand.u32 %s282, 1
          %s838 = scalar_lea.sflag [#allocation5], %s837
          %s839 = sand.u32 %s282, 1
          %s840 = smul.addr %s839, 8
          %s841 = scalar_lea.vmem [#allocation17], %s840
          %842 = dma.done %s838, 128
        $region104: #{tpu_custom_call.1} parent=99 // pred_fallthru
          _
      $region100: #{tpu_custom_call.1} parent=5 // pred_fallthru
        _
    $region6: #{tpu_custom_call.1} parent=1 // loop_footer
      %s36 = sadd.s32 1, %s32
    $region7: #{tpu_custom_call.1} parent=1 // loop_footer_branch
      %31 = sbr.rel target = $region3
    $region8: #{tpu_custom_call.1} parent=1 // loop_exit
      _
    %843 = vsyncpa [#allocation4], 1
    %s844 = scalar_lea.sflag [#allocation4], 1
    %845 = vsyncpa %s844, 1
    %846 = vsyncpa [#allocation7], 1
    %s847 = scalar_lea.sflag [#allocation7], 1
    %848 = vsyncpa %s847, 1
    %849 = vsyncpa [#allocation10], 1
    %s850 = scalar_lea.sflag [#allocation10], 1
    %851 = vsyncpa %s850, 1
    %852 = vsyncpa [#allocation13], 1
    %s853 = scalar_lea.sflag [#allocation13], 1
    %854 = vsyncpa %s853, 1
    %855 = vsyncpa [#allocation16], 1
    %s856 = scalar_lea.sflag [#allocation16], 1
    %857 = vsyncpa %s856, 1
    %858 = vsyncpa [#allocation5], 1
    %s859 = scalar_lea.sflag [#allocation5], 1
    %860 = vsyncpa %s859, 1

</llo_original>
